<compile_context>
chip_gen: v6e
topology: v6e:2x2x1
jax: 0.10.0
libtpu: 0.0.40
codegen_flags: <defaults>
</compile_context>

<pallas_src>
from functools import partial

import jax
import jax.numpy as jnp
from jax.experimental import pallas as pl
from jax.experimental.pallas import tpu as pltpu


def _round_up(v, mult):
    return (v + mult - 1) // mult * mult


def _choose_m_tile(m_pad, n_batches, c_pad, ph, cap=2048):
    """Largest lane-dense tile dividing m_pad (capped for VMEM), keeping at
    least 2 parallel grid iterations when possible (v7x has 2 TensorCores)."""
    # Keep the per-step Stage-1 result (c_pad*ph, m_tile) f32 comfortably small.
    vmem_cap = max(128, (4 * 1024 * 1024 // (c_pad * ph * 4)) // 128 * 128)
    cap = max(128, min(cap, vmem_cap))
    cands = [t for t in range(128, m_pad + 1, 128)
             if m_pad % t == 0 and t <= cap]
    tile = max(cands)
    if n_batches * (m_pad // tile) < 2:
        splittable = [t for t in cands if m_pad // t >= 2]
        if splittable:           # only split if >=2 tiles of >=128 lanes exist
            tile = max(splittable)
    return tile


def _grid_sample_kernel(xp_ref, g_ref, o_ref, *, h_in, w_in, ph, pw, c_pad):
    """One (batch, M-tile) grid step.

    xp_ref : (1, c_pad*ph, pw)  zero-padded image (halo + align + channel pad)
    g_ref  : (1, 2, MT)         row 0 = grid x coords, row 1 = grid y coords
    o_ref  : (1, c_pad, MT)
    """
    g = g_ref[0]
    gx = g[0:1, :].astype(jnp.float32)          # (1, MT)
    gy = g[1:2, :].astype(jnp.float32)

    # align_corners=False coordinate mapping (same as the PyTorch reference)
    x = ((gx + 1.0) * w_in - 1.0) * 0.5
    y = ((gy + 1.0) * h_in - 1.0) * 0.5
    x0f = jnp.floor(x)
    y0f = jnp.floor(y)

    # Separable bilinear weights, computed BEFORE clipping (as in reference).
    wx1 = x - x0f
    wx0 = 1.0 - wx1            # == (x0f + 1) - x
    wy1 = y - y0f
    wy0 = 1.0 - wy1

    # Shift into padded-image coordinates and clip (zero-padding semantics:
    # clipped corners land in the zero halo, so summing weights is exact).
    x0i = x0f.astype(jnp.int32)
    y0i = y0f.astype(jnp.int32)
    x0 = jnp.clip(x0i + 1, 0, w_in + 1)
    x1 = jnp.clip(x0i + 2, 0, w_in + 1)
    y0 = jnp.clip(y0i + 1, 0, h_in + 1)
    y1 = jnp.clip(y0i + 2, 0, h_in + 1)

    mt = gx.shape[-1]

    # Column-selection weights Wx: (pw, MT).
    col = jax.lax.broadcasted_iota(jnp.int32, (pw, mt), 0)
    wx_mat = (jnp.where(col == x0, wx0, 0.0) +
              jnp.where(col == x1, wx1, 0.0))

    # Row-selection weights Wy: (ph, MT).
    row = jax.lax.broadcasted_iota(jnp.int32, (ph, mt), 0)
    wy_mat = (jnp.where(row == y0, wy0, 0.0) +
              jnp.where(row == y1, wy1, 0.0))

    # Stage 1 (MXU): horizontal interpolation for every padded image row.
    #   s[c*ph + h, m] = wx0[m]*xp[c, h, x0[m]] + wx1[m]*xp[c, h, x1[m]]
    # Precision pinned so the f32 matmul never drops to a bf16 pass.
    s = jnp.dot(xp_ref[0].astype(jnp.float32), wx_mat,
                preferred_element_type=jnp.float32,
                precision=jax.lax.Precision.HIGHEST)          # (c_pad*ph, MT)

    # Stage 2 (vectorized): vertical blend for ALL channels at once.
    # ph % 8 == 0 -> the reshape is tile-aligned and layout-free.
    s3 = s.reshape(c_pad, ph, mt)                             # (c_pad, ph, MT)
    out = jnp.sum(s3 * wy_mat[None, :, :], axis=1)            # (c_pad, MT)

    # Single, full (8-sublane, lane-dense) unmasked store.
    o_ref[0] = out.astype(o_ref.dtype)


def bilinear_grid_sample_pallas(x, grid, align_corners=False):
    assert not align_corners, "only align_corners=False (as in the module)"
    n, c, h, w = x.shape
    gn, gh, gw, two = grid.shape
    assert gn == n and two == 2

    m = gh * gw
    ph = _round_up(h + 2, 8)        # padded rows, sublane aligned
    pw = _round_up(w + 2, 8)        # padded cols, sublane aligned
    c_pad = _round_up(c, 8)         # sublane-dense output stores
    m_pad = _round_up(m, 128)       # lane padding decoupled from tile size
    m_tile = _choose_m_tile(m_pad, n, c_pad, ph)
    n_mtiles = m_pad // m_tile

    # Zero-pad: 1px halo (padding_mode='zeros') + alignment + channel pad.
    x_pad = jnp.pad(x, ((0, 0), (0, c_pad - c),
                        (1, ph - (h + 1)), (1, pw - (w + 1))))
    x_flat = x_pad.reshape(n, c_pad * ph, pw)

    # grid -> (N, 2, M_pad); dummy points in the pad region are sliced off.
    g = grid.reshape(n, m, 2).transpose(0, 2, 1)
    if m_pad != m:
        g = jnp.pad(g, ((0, 0), (0, 0), (0, m_pad - m)), constant_values=-1.0)

    kernel = partial(_grid_sample_kernel, h_in=h, w_in=w, ph=ph, pw=pw,
                     c_pad=c_pad)

    itemsize = jnp.dtype(x.dtype).itemsize
    cost = pl.CostEstimate(
        flops=2 * n * (c_pad * ph) * pw * m_pad + 2 * n * c_pad * ph * m_pad,
        transcendentals=0,
        bytes_accessed=(x_flat.size * itemsize
                        + g.size * jnp.dtype(g.dtype).itemsize
                        + n * c_pad * m_pad * itemsize))

    out = pl.pallas_call(
        kernel,
        out_shape=jax.ShapeDtypeStruct((n, c_pad, m_pad), x.dtype),
        grid_spec=pltpu.PrefetchScalarGridSpec(
            num_scalar_prefetch=0,
            grid=(n, n_mtiles),
            in_specs=[
                pl.BlockSpec((1, c_pad * ph, pw), lambda b, j: (b, 0, 0)),
                pl.BlockSpec((1, 2, m_tile), lambda b, j: (b, 0, j)),
            ],
            out_specs=pl.BlockSpec((1, c_pad, m_tile), lambda b, j: (b, 0, j)),
        ),
        compiler_params=pltpu.CompilerParams(
            dimension_semantics=("parallel", "parallel"),
            vmem_limit_bytes=32 * 1024 * 1024),
        cost_estimate=cost,
    )(x_flat, g)

    return out[:, :c, :m].reshape(n, c, gh, gw)


def _bilinear_grid_sample_ref(im, grid):
    # Pure-JAX port of the PyTorch reference (align_corners=False) for checks.
    n, c, h, w = im.shape
    gn, gh, gw, _ = grid.shape
    gx = grid[..., 0].reshape(n, -1)
    gy = grid[..., 1].reshape(n, -1)
    x = ((gx + 1) * w - 1) / 2
    y = ((gy + 1) * h - 1) / 2
    x0 = jnp.floor(x).astype(jnp.int32)
    y0 = jnp.floor(y).astype(jnp.int32)
    x1 = x0 + 1
    y1 = y0 + 1
    wa = ((x1 - x) * (y1 - y))[:, None, :]
    wb = ((x1 - x) * (y - y0))[:, None, :]
    wc = ((x - x0) * (y1 - y))[:, None, :]
    wd = ((x - x0) * (y - y0))[:, None, :]
    im_p = jnp.pad(im, ((0, 0), (0, 0), (1, 1), (1, 1)))
    ph, pw = h + 2, w + 2
    x0 = jnp.clip(x0 + 1, 0, pw - 1)
    x1 = jnp.clip(x1 + 1, 0, pw - 1)
    y0 = jnp.clip(y0 + 1, 0, ph - 1)
    y1 = jnp.clip(y1 + 1, 0, ph - 1)
    im_f = im_p.reshape(n, c, -1)

    def gather(idx):
        return jnp.take_along_axis(
            im_f, jnp.broadcast_to(idx[:, None, :], (n, c, idx.shape[-1])),
            axis=2)

    Ia = gather(x0 + y0 * pw)
    Ib = gather(x0 + y1 * pw)
    Ic = gather(x1 + y0 * pw)
    Id = gather(x1 + y1 * pw)
    return (Ia * wa + Ib * wb + Ic * wc + Id * wd).reshape(n, c, gh, gw)


class Sampler:
    """JAX/Pallas equivalent of the PyTorch Sampler module (no parameters)."""

    def __call__(self, x, grid):
        return bilinear_grid_sample_pallas(x, grid, align_corners=False)


if __name__ == "__main__":
    key = jax.random.PRNGKey(0)
    k1, k2, k3, k4, k5 = jax.random.split(key, 5)

    sampler = Sampler()

    # Shapes from the module: x (1, 4, 10, 10), grid (1, 8, 8, 2) in [-1, 1].
    x1 = jax.random.normal(k1, (1, 4, 10, 10), dtype=jnp.float32)
    g1 = 2.0 * jax.random.uniform(k2, (1, 8, 8, 2), dtype=jnp.float32) - 1.0
    out1 = jax.block_until_ready(sampler(x1, g1))
    ref1 = _bilinear_grid_sample_ref(x1, g1)
    assert out1.shape == (1, 4, 8, 8)
    assert jnp.allclose(out1, ref1, atol=1e-5, rtol=1e-5), "mismatch (case 1)"

    # Batch > 1, non-square image, channel-pad path, single wide 256-lane tile.
    x2 = jax.random.normal(k3, (2, 3, 9, 13), dtype=jnp.float32)
    g2 = 2.0 * jax.random.uniform(k4, (2, 12, 16, 2), dtype=jnp.float32) - 1.0
    out2 = jax.block_until_ready(sampler(x2, g2))
    ref2 = _bilinear_grid_sample_ref(x2, g2)
    assert out2.shape == (2, 3, 12, 16)
    assert jnp.allclose(out2, ref2, atol=1e-5, rtol=1e-5), "mismatch (case 2)"

    # N=1 with M large enough to split into >=2 parallel M-tiles (v7x path).
    g3 = 2.0 * jax.random.uniform(k5, (1, 20, 20, 2), dtype=jnp.float32) - 1.0
    out3 = jax.block_until_ready(sampler(x1, g3))
    ref3 = _bilinear_grid_sample_ref(x1, g3)
    assert out3.shape == (1, 4, 20, 20)
    assert jnp.allclose(out3, ref3, atol=1e-5, rtol=1e-5), "mismatch (case 3)"

    print("KERNEL_OK")
</pallas_src>

<mosaic_0001>
module attributes {stable_mosaic.version = 11 : i64} {
  func.func @_grid_sample_kernel(%arg0: i32, %arg1: i32, %arg2: memref<1x128x16xf32, #tpu.memory_space<vmem>>, %arg3: memref<1x2x128xf32, #tpu.memory_space<vmem>>, %arg4: memref<1x8x128xf32, #tpu.memory_space<vmem>>) attributes {dimension_semantics = [#tpu.dimension_semantics<parallel>, #tpu.dimension_semantics<parallel>], iteration_bounds = array<i64: 1, 1>, scalar_prefetch = 0 : i64, scratch_operands = 0 : i64, tpu.core_type = #tpu.core_type<tc>, window_params = [{transform_indices = @transform_0, window_bounds = array<i64: 1, 128, 16>}, {transform_indices = @transform_1, window_bounds = array<i64: 1, 2, 128>}, {transform_indices = @transform_2, window_bounds = array<i64: 1, 8, 128>}]} {
    %c0 = arith.constant 0 : index
    %c0_0 = arith.constant 0 : index
    %c0_1 = arith.constant 0 : index
    %0 = vector.load %arg3[%c0, %c0_0, %c0_1] : memref<1x2x128xf32, #tpu.memory_space<vmem>>, vector<1x2x128xf32>
    %1 = vector.shape_cast %0 : vector<1x2x128xf32> to vector<2x128xf32>
    %2 = vector.extract_strided_slice %1 {offsets = [0, 0], sizes = [1, 128], strides = [1, 1]} : vector<2x128xf32> to vector<1x128xf32>
    %3 = vector.extract_strided_slice %1 {offsets = [1, 0], sizes = [1, 128], strides = [1, 1]} : vector<2x128xf32> to vector<1x128xf32>
    %cst = arith.constant 1.000000e+00 : f32
    %4 = vector.broadcast %cst : f32 to vector<1x128xf32>
    %5 = arith.addf %2, %4 : vector<1x128xf32>
    %cst_2 = arith.constant 1.000000e+01 : f32
    %6 = vector.broadcast %cst_2 : f32 to vector<1x128xf32>
    %7 = arith.mulf %5, %6 : vector<1x128xf32>
    %cst_3 = arith.constant 1.000000e+00 : f32
    %8 = vector.broadcast %cst_3 : f32 to vector<1x128xf32>
    %9 = arith.subf %7, %8 : vector<1x128xf32>
    %cst_4 = arith.constant 5.000000e-01 : f32
    %10 = vector.broadcast %cst_4 : f32 to vector<1x128xf32>
    %11 = arith.mulf %9, %10 : vector<1x128xf32>
    %cst_5 = arith.constant 1.000000e+00 : f32
    %12 = vector.broadcast %cst_5 : f32 to vector<1x128xf32>
    %13 = arith.addf %3, %12 : vector<1x128xf32>
    %cst_6 = arith.constant 1.000000e+01 : f32
    %14 = vector.broadcast %cst_6 : f32 to vector<1x128xf32>
    %15 = arith.mulf %13, %14 : vector<1x128xf32>
    %cst_7 = arith.constant 1.000000e+00 : f32
    %16 = vector.broadcast %cst_7 : f32 to vector<1x128xf32>
    %17 = arith.subf %15, %16 : vector<1x128xf32>
    %cst_8 = arith.constant 5.000000e-01 : f32
    %18 = vector.broadcast %cst_8 : f32 to vector<1x128xf32>
    %19 = arith.mulf %17, %18 : vector<1x128xf32>
    %20 = math.floor %11 : vector<1x128xf32>
    %21 = math.floor %19 : vector<1x128xf32>
    %22 = arith.subf %11, %20 : vector<1x128xf32>
    %cst_9 = arith.constant 1.000000e+00 : f32
    %23 = vector.broadcast %cst_9 : f32 to vector<1x128xf32>
    %24 = arith.subf %23, %22 : vector<1x128xf32>
    %25 = arith.subf %19, %21 : vector<1x128xf32>
    %cst_10 = arith.constant 1.000000e+00 : f32
    %26 = vector.broadcast %cst_10 : f32 to vector<1x128xf32>
    %27 = arith.subf %26, %25 : vector<1x128xf32>
    %28 = arith.fptosi %20 : vector<1x128xf32> to vector<1x128xi32>
    %29 = arith.fptosi %21 : vector<1x128xf32> to vector<1x128xi32>
    %c1_i32 = arith.constant 1 : i32
    %30 = vector.broadcast %c1_i32 : i32 to vector<1x128xi32>
    %31 = arith.addi %28, %30 : vector<1x128xi32>
    %c0_i32 = arith.constant 0 : i32
    %c11_i32 = arith.constant 11 : i32
    %32 = vector.broadcast %c0_i32 : i32 to vector<1x128xi32>
    %33 = arith.maxsi %32, %31 : vector<1x128xi32>
    %34 = vector.broadcast %c11_i32 : i32 to vector<1x128xi32>
    %35 = arith.minsi %34, %33 : vector<1x128xi32>
    %c2_i32 = arith.constant 2 : i32
    %36 = vector.broadcast %c2_i32 : i32 to vector<1x128xi32>
    %37 = arith.addi %28, %36 : vector<1x128xi32>
    %c0_i32_11 = arith.constant 0 : i32
    %c11_i32_12 = arith.constant 11 : i32
    %38 = vector.broadcast %c0_i32_11 : i32 to vector<1x128xi32>
    %39 = arith.maxsi %38, %37 : vector<1x128xi32>
    %40 = vector.broadcast %c11_i32_12 : i32 to vector<1x128xi32>
    %41 = arith.minsi %40, %39 : vector<1x128xi32>
    %c1_i32_13 = arith.constant 1 : i32
    %42 = vector.broadcast %c1_i32_13 : i32 to vector<1x128xi32>
    %43 = arith.addi %29, %42 : vector<1x128xi32>
    %c0_i32_14 = arith.constant 0 : i32
    %c11_i32_15 = arith.constant 11 : i32
    %44 = vector.broadcast %c0_i32_14 : i32 to vector<1x128xi32>
    %45 = arith.maxsi %44, %43 : vector<1x128xi32>
    %46 = vector.broadcast %c11_i32_15 : i32 to vector<1x128xi32>
    %47 = arith.minsi %46, %45 : vector<1x128xi32>
    %c2_i32_16 = arith.constant 2 : i32
    %48 = vector.broadcast %c2_i32_16 : i32 to vector<1x128xi32>
    %49 = arith.addi %29, %48 : vector<1x128xi32>
    %c0_i32_17 = arith.constant 0 : i32
    %c11_i32_18 = arith.constant 11 : i32
    %50 = vector.broadcast %c0_i32_17 : i32 to vector<1x128xi32>
    %51 = arith.maxsi %50, %49 : vector<1x128xi32>
    %52 = vector.broadcast %c11_i32_18 : i32 to vector<1x128xi32>
    %53 = arith.minsi %52, %51 : vector<1x128xi32>
    %54 = tpu.iota {dimensions = array<i32: 0>} : vector<16x128xi32>
    %55 = vector.broadcast %35 : vector<1x128xi32> to vector<16x128xi32>
    %56 = arith.cmpi eq, %54, %55 : vector<16x128xi32>
    %cst_19 = arith.constant 0.000000e+00 : f32
    %57 = vector.shape_cast %24 : vector<1x128xf32> to vector<1x128xf32>
    %58 = vector.broadcast %57 : vector<1x128xf32> to vector<16x128xf32>
    %59 = vector.broadcast %cst_19 : f32 to vector<16x128xf32>
    %60 = arith.select %56, %58, %59 : vector<16x128xi1>, vector<16x128xf32>
    %61 = vector.broadcast %41 : vector<1x128xi32> to vector<16x128xi32>
    %62 = arith.cmpi eq, %54, %61 : vector<16x128xi32>
    %cst_20 = arith.constant 0.000000e+00 : f32
    %63 = vector.shape_cast %22 : vector<1x128xf32> to vector<1x128xf32>
    %64 = vector.broadcast %63 : vector<1x128xf32> to vector<16x128xf32>
    %65 = vector.broadcast %cst_20 : f32 to vector<16x128xf32>
    %66 = arith.select %62, %64, %65 : vector<16x128xi1>, vector<16x128xf32>
    %67 = arith.addf %60, %66 : vector<16x128xf32>
    %68 = tpu.iota {dimensions = array<i32: 0>} : vector<16x128xi32>
    %69 = vector.broadcast %47 : vector<1x128xi32> to vector<16x128xi32>
    %70 = arith.cmpi eq, %68, %69 : vector<16x128xi32>
    %cst_21 = arith.constant 0.000000e+00 : f32
    %71 = vector.shape_cast %27 : vector<1x128xf32> to vector<1x128xf32>
    %72 = vector.broadcast %71 : vector<1x128xf32> to vector<16x128xf32>
    %73 = vector.broadcast %cst_21 : f32 to vector<16x128xf32>
    %74 = arith.select %70, %72, %73 : vector<16x128xi1>, vector<16x128xf32>
    %75 = vector.broadcast %53 : vector<1x128xi32> to vector<16x128xi32>
    %76 = arith.cmpi eq, %68, %75 : vector<16x128xi32>
    %cst_22 = arith.constant 0.000000e+00 : f32
    %77 = vector.shape_cast %25 : vector<1x128xf32> to vector<1x128xf32>
    %78 = vector.broadcast %77 : vector<1x128xf32> to vector<16x128xf32>
    %79 = vector.broadcast %cst_22 : f32 to vector<16x128xf32>
    %80 = arith.select %76, %78, %79 : vector<16x128xi1>, vector<16x128xf32>
    %81 = arith.addf %74, %80 : vector<16x128xf32>
    %c0_23 = arith.constant 0 : index
    %c0_24 = arith.constant 0 : index
    %c0_25 = arith.constant 0 : index
    %82 = vector.load %arg2[%c0_23, %c0_24, %c0_25] : memref<1x128x16xf32, #tpu.memory_space<vmem>>, vector<1x128x16xf32>
    %83 = vector.shape_cast %82 : vector<1x128x16xf32> to vector<128x16xf32>
    %cst_26 = arith.constant dense<0.000000e+00> : vector<128x128xf32>
    %84 = tpu.matmul %83, %67, %cst_26 {dimension_numbers = #tpu.dot_dimension_numbers<[1], [0], [0], [1], [0, 0, 1, 1], [], []>, precision = #tpu.contract_precision<fp32>} : vector<128x16xf32>, vector<16x128xf32>, vector<128x128xf32> -> vector<128x128xf32>
    %85 = vector.shape_cast %84 : vector<128x128xf32> to vector<8x16x128xf32>
    %86 = vector.shape_cast %81 : vector<16x128xf32> to vector<1x16x128xf32>
    %87 = vector.broadcast %86 : vector<1x16x128xf32> to vector<8x16x128xf32>
    %88 = arith.mulf %85, %87 : vector<8x16x128xf32>
    %cst_27 = arith.constant dense<0.000000e+00> : vector<8x128xf32>
    %89 = vector.multi_reduction <add>, %88, %cst_27 [1] : vector<8x16x128xf32> to vector<8x128xf32>
    %c0_28 = arith.constant 0 : index
    %c0_29 = arith.constant 0 : index
    %c0_30 = arith.constant 0 : index
    %90 = vector.load %arg4[%c0_28, %c0_29, %c0_30] : memref<1x8x128xf32, #tpu.memory_space<vmem>>, vector<1x8x128xf32>
    %91 = vector.shape_cast %90 : vector<1x8x128xf32> to vector<8x128xf32>
    %92 = vector.shape_cast %89 : vector<8x128xf32> to vector<1x8x128xf32>
    tpu.vector_store %arg4[%c0_28, %c0_29, %c0_30], %92 {strides = array<i32>} : memref<1x8x128xf32, #tpu.memory_space<vmem>>, vector<1x8x128xf32>,
    return
  }
  func.func @transform_0(%arg0: i32, %arg1: i32) -> (i32, i32, i32) {
    %c0_i32 = arith.constant 0 : i32
    %c0_i32_0 = arith.constant 0 : i32
    %c0_i32_1 = arith.constant 0 : i32
    return %arg0, %c0_i32, %c0_i32_0 : i32, i32, i32
  }
  func.func @transform_1(%arg0: i32, %arg1: i32) -> (i32, i32, i32) {
    %c0_i32 = arith.constant 0 : i32
    %c0_i32_0 = arith.constant 0 : i32
    return %arg0, %c0_i32, %arg1 : i32, i32, i32
  }
  func.func @transform_2(%arg0: i32, %arg1: i32) -> (i32, i32, i32) {
    %c0_i32 = arith.constant 0 : i32
    %c0_i32_0 = arith.constant 0 : i32
    return %arg0, %c0_i32, %arg1 : i32, i32, i32
  }
}

</mosaic_0001>

<llo_original>
// kernel: tpu_custom_call.1
$region0: #{tpu_custom_call.1}
  #allocation0 [shape = 'u32[]', space=smem, size = 0x4, offset = 0x4, fixed_abs, tag = 'smem constant byte address 0x4 - core index']
  #allocation1 [shape = 'u32[144,128]{1,0:T(1,128)}', space=vmem, size = 0x12000, scoped, tag = 'internal scratch']
  %s0 = inlined_call_operand.vmem [shape: f32[1,128,16], index: 0, kind: input, shape index: {}]
  %s1 = inlined_call_operand.vmem [shape: f32[1,2,128], index: 1, kind: input, shape index: {}]
  %s2 = inlined_call_operand.hbm [shape: f32[1,8,128], index: 2, kind: output, shape index: {}]
  %s3 = sld [smem:[#allocation0]]
  $region18: #{tpu_custom_call.1} parent=0
    _
  %s5 = ssub.s32 1, %s3
  %s6 = scalar_select 0, %s5, %s3
  $region1: #{tpu_custom_call.1} parent=0
    #allocation2 [shape = 'u8[4096]{0}', space=vmem, size = 0x1000, scoped, tag = 'output window, operand 0, single buffered']
    #allocation3 [shape = 's32[1]{0}', space=sflag, size = 0x4, scoped, tag = 'scoped memory for tpu_custom_call.1']
    %7 = vsyncpa [#allocation3], 0
    // Predicated region
    $region2: #{tpu_custom_call.1} parent=1 // pred_check
      _
    $region3: #{tpu_custom_call.1} parent=1 // pred_check_branch
      %9 = sbr.rel (0) target = $region5
    $region4: #{tpu_custom_call.1} parent=1 // pred_region
      _
    $region5: #{tpu_custom_call.1} parent=1 // pred_fallthru
      _
    // Predicated region
    $region6: #{tpu_custom_call.1} parent=1 // pred_check
      _
    $region7: #{tpu_custom_call.1} parent=1 // pred_check_branch
      %11 = sbr.rel (0) target = $region9
    $region8: #{tpu_custom_call.1} parent=1 // pred_region
      _
    $region9: #{tpu_custom_call.1} parent=1 // pred_fallthru
      _
    %v12 = vld [vmem:[%s1] sm:$0x3]
    %v13 = vadd.f32 %v12, 1.0
    %v14 = vmul.f32 %v13, 10.0
    %v15 = vsub.f32 %v14, 1.0
    %v16 = vmul.f32 %v15, 0.5
    %v17 = vfloor.f32 %v16
    %v18 = vsub.f32 %v16, %v17
    %v19 = vsub.f32 1.0, %v18
    %v20 = vcvt.f32.s32.to.zero.pseudo %v17
    %v21 = vadd.s32 %v20, 1
    %vm22 = vcmp.gt.s32.totalorder %v21, 0
    %v23 = vsel %vm22, %v21, 0
    %vm24 = vcmp.lt.s32.totalorder %v23, 11
    %v25 = vsel %vm24, %v23, 11
    %v26 = vadd.s32 %v20, 2
    %vm27 = vcmp.gt.s32.totalorder %v26, 0
    %v28 = vsel %vm27, %v26, 0
    %vm29 = vcmp.lt.s32.totalorder %v28, 11
    %v30 = vsel %vm29, %v28, 11
    %v31 = vlaneseq
    %v32 = vshrl.u32 %v31, 7
    %v33 = vadd.s32 %v32, 8
    %v34 = vlaneseq
    %v35 = vshrl.u32 %v34, 7
    %v36 = vsub.s32 0, %v35
    %v37 = vrot.slane %v25, %v36
    %vm38 = vcmp.eq.s32.totalorder %v32, %v37
    %vm39 = vcmp.eq.s32.totalorder %v33, %v37
    %v40 = vlaneseq
    %v41 = vshrl.u32 %v40, 7
    %v42 = vsub.s32 0, %v41
    %v43 = vrot.slane %v19, %v42
    %v44 = vsel %vm38, %v43, 0.0
    %v45 = vsel %vm39, %v43, 0.0
    %v46 = vlaneseq
    %v47 = vshrl.u32 %v46, 7
    %v48 = vsub.s32 0, %v47
    %v49 = vrot.slane %v30, %v48
    %vm50 = vcmp.eq.s32.totalorder %v32, %v49
    %vm51 = vcmp.eq.s32.totalorder %v33, %v49
    %v52 = vlaneseq
    %v53 = vshrl.u32 %v52, 7
    %v54 = vsub.s32 0, %v53
    %v55 = vrot.slane %v18, %v54
    %v56 = vsel %vm50, %v55, 0.0
    %v57 = vsel %vm51, %v55, 0.0
    %v58 = vadd.f32 %v44, %v56
    %v59 = vadd.f32 %v45, %v57
    %v60 = vlaneseq
    %v61 = vshrl.u32 %v60, 7
    %v62 = vsub.s32 1, %v61
    %v63 = vrot.slane %v25, %v62
    %vm64 = vcmp.eq.s32.totalorder %v32, %v63
    %vm65 = vcmp.eq.s32.totalorder %v33, %v63
    %v66 = vlaneseq
    %v67 = vshrl.u32 %v66, 7
    %v68 = vsub.s32 1, %v67
    %v69 = vrot.slane %v19, %v68
    %v70 = vsel %vm64, %v69, 0.0
    %v71 = vsel %vm65, %v69, 0.0
    %v72 = vlaneseq
    %v73 = vshrl.u32 %v72, 7
    %v74 = vsub.s32 1, %v73
    %v75 = vrot.slane %v30, %v74
    %vm76 = vcmp.eq.s32.totalorder %v32, %v75
    %vm77 = vcmp.eq.s32.totalorder %v33, %v75
    %v78 = vlaneseq
    %v79 = vshrl.u32 %v78, 7
    %v80 = vsub.s32 1, %v79
    %v81 = vrot.slane %v18, %v80
    %v82 = vsel %vm76, %v81, 0.0
    %v83 = vsel %vm77, %v81, 0.0
    %v84 = vadd.f32 %v70, %v82
    %v85 = vadd.f32 %v71, %v83
    %v86 = vld [vmem:[%s0] sm:$0xff]
    %v87 = vld [vmem:[%s0 + $0x8] sm:$0xff]
    %v88 = vld [vmem:[%s0 + $0x10] sm:$0xff]
    %v89 = vld [vmem:[%s0 + $0x18] sm:$0xff]
    %v90 = vld [vmem:[%s0 + $0x20] sm:$0xff]
    %v91 = vld [vmem:[%s0 + $0x28] sm:$0xff]
    %v92 = vld [vmem:[%s0 + $0x30] sm:$0xff]
    %v93 = vld [vmem:[%s0 + $0x38] sm:$0xff]
    %v94 = vld [vmem:[%s0 + $0x40] sm:$0xff]
    %v95 = vld [vmem:[%s0 + $0x48] sm:$0xff]
    %v96 = vld [vmem:[%s0 + $0x50] sm:$0xff]
    %v97 = vld [vmem:[%s0 + $0x58] sm:$0xff]
    %v98 = vld [vmem:[%s0 + $0x60] sm:$0xff]
    %v99 = vld [vmem:[%s0 + $0x68] sm:$0xff]
    %v100 = vld [vmem:[%s0 + $0x70] sm:$0xff]
    %v101 = vld [vmem:[%s0 + $0x78] sm:$0xff]
    %vm102 = vcmask 130048
    %v104 = vsel %vm102, %v86, 0
    %v107 = vsel %vm102, %v87, 0
    %v110 = vsel %vm102, %v88, 0
    %v113 = vsel %vm102, %v89, 0
    %v116 = vsel %vm102, %v90, 0
    %v119 = vsel %vm102, %v91, 0
    %v122 = vsel %vm102, %v92, 0
    %v125 = vsel %vm102, %v93, 0
    %v128 = vsel %vm102, %v94, 0
    %v131 = vsel %vm102, %v95, 0
    %v134 = vsel %vm102, %v96, 0
    %v137 = vsel %vm102, %v97, 0
    %v140 = vsel %vm102, %v98, 0
    %v143 = vsel %vm102, %v99, 0
    %v146 = vsel %vm102, %v100, 0
    %v149 = vsel %vm102, %v101, 0
    %151 = vmatprep.subr.mxu0 0.0
    %152 = vmatpush1.msra.mxu0 0.0
    %153 = vmatprep.subr.mxu0 0.0
    %154 = vmatpush1.msra.mxu0 0.0
    %155 = vmatprep.subr.mxu0 0.0
    %156 = vmatpush1.msra.mxu0 0.0
    %157 = vmatprep.subr.mxu0 0.0
    %158 = vmatpush1.msra.mxu0 0.0
    %159 = vmatprep.subr.mxu0 0.0
    %160 = vmatpush1.msra.mxu0 0.0
    %161 = vmatprep.subr.mxu0 0.0
    %162 = vmatpush1.msra.mxu0 0.0
    %163 = vmatprep.subr.mxu0 0.0
    %164 = vmatpush1.msra.mxu0 0.0
    %165 = vmatprep.subr.mxu0 0.0
    %166 = vmatpush1.msra.mxu0 0.0
    %167 = vmatprep.subr.mxu0 0.0
    %168 = vmatpush1.msra.mxu0 0.0
    %169 = vmatprep.subr.mxu0 0.0
    %170 = vmatpush1.msra.mxu0 0.0
    %171 = vmatprep.subr.mxu0 0.0
    %172 = vmatpush1.msra.mxu0 0.0
    %173 = vmatprep.subr.mxu0 0.0
    %174 = vmatpush1.msra.mxu0 0.0
    %175 = vmatprep.subr.mxu0 0.0
    %176 = vmatpush1.msra.mxu0 0.0
    %177 = vmatprep.subr.mxu0 0.0
    %178 = vmatpush1.msra.mxu0 0.0
    %179 = vmatprep.subr.mxu0 0.0
    %v180 = vand.u32 %v59, 4294901760
    %181 = vmatpush1.msra.mxu0 %v180
    %182 = vmatprep.subr.mxu0 0.0
    %v183 = vand.u32 %v58, 4294901760
    %184 = vmatpush1.msra.mxu0 %v183
    %185 = vmatprep.subr.mxu0 0.0
    %186 = vmatpush2.msra.mxu0 0.0
    %187 = vmatprep.subr.mxu0 0.0
    %188 = vmatpush2.msra.mxu0 0.0
    %189 = vmatprep.subr.mxu0 0.0
    %190 = vmatpush2.msra.mxu0 0.0
    %191 = vmatprep.subr.mxu0 0.0
    %192 = vmatpush2.msra.mxu0 0.0
    %193 = vmatprep.subr.mxu0 0.0
    %194 = vmatpush2.msra.mxu0 0.0
    %195 = vmatprep.subr.mxu0 0.0
    %196 = vmatpush2.msra.mxu0 0.0
    %197 = vmatprep.subr.mxu0 0.0
    %198 = vmatpush2.msra.mxu0 0.0
    %199 = vmatprep.subr.mxu0 0.0
    %200 = vmatpush2.msra.mxu0 0.0
    %201 = vmatprep.subr.mxu0 0.0
    %202 = vmatpush2.msra.mxu0 0.0
    %203 = vmatprep.subr.mxu0 0.0
    %204 = vmatpush2.msra.mxu0 0.0
    %205 = vmatprep.subr.mxu0 0.0
    %206 = vmatpush2.msra.mxu0 0.0
    %207 = vmatprep.subr.mxu0 0.0
    %208 = vmatpush2.msra.mxu0 0.0
    %209 = vmatprep.subr.mxu0 0.0
    %210 = vmatpush2.msra.mxu0 0.0
    %211 = vmatprep.subr.mxu0 0.0
    %212 = vmatpush2.msra.mxu0 0.0
    %213 = vmatprep.subr.mxu0 0.0
    %214 = vmatpush2.msra.mxu0 0.0
    %215 = vmatprep.subr.mxu0 0.0
    %216 = vmatpush2.msra.mxu0 0.0
    %217 = vmatprep.mubr.f32.mxu0 0.0
    %v218 = vand.u32 %v104, 4294901760
    %v219 = vsub.f32 %v104, %v218
    %v220 = vand.u32 %v219, 4294901760
    %v221 = vsub.f32 %v219, %v220
    %v222 = vand.u32 %v221, 4294901760
    %223 = vmatmul.mubr.f32.gmra.mxu0 %v222
    %v224 = vpop.f32.mrf.mxu0
    %v225 = vadd.f32 0.0, %v224
    %v226 = vpop.f32.mrf.mxu0
    %227 = vmatprep.mubr.f32.mxu0 0.0
    %v228 = vand.u32 %v107, 4294901760
    %v229 = vsub.f32 %v107, %v228
    %v230 = vand.u32 %v229, 4294901760
    %v231 = vsub.f32 %v229, %v230
    %v232 = vand.u32 %v231, 4294901760
    %233 = vmatmul.mubr.f32.gmra.mxu0 %v232
    %v234 = vpop.f32.mrf.mxu0
    %v235 = vadd.f32 0.0, %v234
    %v236 = vpop.f32.mrf.mxu0
    %237 = vmatprep.mubr.f32.mxu0 0.0
    %v238 = vand.u32 %v110, 4294901760
    %v239 = vsub.f32 %v110, %v238
    %v240 = vand.u32 %v239, 4294901760
    %v241 = vsub.f32 %v239, %v240
    %v242 = vand.u32 %v241, 4294901760
    %243 = vmatmul.mubr.f32.gmra.mxu0 %v242
    %v244 = vpop.f32.mrf.mxu0
    %v245 = vadd.f32 0.0, %v244
    %v246 = vpop.f32.mrf.mxu0
    %247 = vmatprep.mubr.f32.mxu0 0.0
    %v248 = vand.u32 %v113, 4294901760
    %v249 = vsub.f32 %v113, %v248
    %v250 = vand.u32 %v249, 4294901760
    %v251 = vsub.f32 %v249, %v250
    %v252 = vand.u32 %v251, 4294901760
    %253 = vmatmul.mubr.f32.gmra.mxu0 %v252
    %v254 = vpop.f32.mrf.mxu0
    %v255 = vadd.f32 0.0, %v254
    %v256 = vpop.f32.mrf.mxu0
    %257 = vmatprep.mubr.f32.mxu0 0.0
    %v258 = vand.u32 %v116, 4294901760
    %v259 = vsub.f32 %v116, %v258
    %v260 = vand.u32 %v259, 4294901760
    %v261 = vsub.f32 %v259, %v260
    %v262 = vand.u32 %v261, 4294901760
    %263 = vmatmul.mubr.f32.gmra.mxu0 %v262
    %v264 = vpop.f32.mrf.mxu0
    %v265 = vadd.f32 0.0, %v264
    %v266 = vpop.f32.mrf.mxu0
    %267 = vmatprep.mubr.f32.mxu0 0.0
    %v268 = vand.u32 %v119, 4294901760
    %v269 = vsub.f32 %v119, %v268
    %v270 = vand.u32 %v269, 4294901760
    %v271 = vsub.f32 %v269, %v270
    %v272 = vand.u32 %v271, 4294901760
    %273 = vmatmul.mubr.f32.gmra.mxu0 %v272
    %v274 = vpop.f32.mrf.mxu0
    %v275 = vadd.f32 0.0, %v274
    %v276 = vpop.f32.mrf.mxu0
    %277 = vmatprep.mubr.f32.mxu0 0.0
    %v278 = vand.u32 %v122, 4294901760
    %v279 = vsub.f32 %v122, %v278
    %v280 = vand.u32 %v279, 4294901760
    %v281 = vsub.f32 %v279, %v280
    %v282 = vand.u32 %v281, 4294901760
    %283 = vmatmul.mubr.f32.gmra.mxu0 %v282
    %v284 = vpop.f32.mrf.mxu0
    %v285 = vadd.f32 0.0, %v284
    %v286 = vpop.f32.mrf.mxu0
    %287 = vmatprep.mubr.f32.mxu0 0.0
    %v288 = vand.u32 %v125, 4294901760
    %v289 = vsub.f32 %v125, %v288
    %v290 = vand.u32 %v289, 4294901760
    %v291 = vsub.f32 %v289, %v290
    %v292 = vand.u32 %v291, 4294901760
    %293 = vmatmul.mubr.f32.gmra.mxu0 %v292
    %v294 = vpop.f32.mrf.mxu0
    %v295 = vadd.f32 0.0, %v294
    %v296 = vpop.f32.mrf.mxu0
    %297 = vmatprep.mubr.f32.mxu0 0.0
    %v298 = vand.u32 %v128, 4294901760
    %v299 = vsub.f32 %v128, %v298
    %v300 = vand.u32 %v299, 4294901760
    %v301 = vsub.f32 %v299, %v300
    %v302 = vand.u32 %v301, 4294901760
    %303 = vmatmul.mubr.f32.gmra.mxu0 %v302
    %v304 = vpop.f32.mrf.mxu0
    %v305 = vadd.f32 0.0, %v304
    %v306 = vpop.f32.mrf.mxu0
    %307 = vmatprep.mubr.f32.mxu0 0.0
    %v308 = vand.u32 %v131, 4294901760
    %v309 = vsub.f32 %v131, %v308
    %v310 = vand.u32 %v309, 4294901760
    %v311 = vsub.f32 %v309, %v310
    %v312 = vand.u32 %v311, 4294901760
    %313 = vmatmul.mubr.f32.gmra.mxu0 %v312
    %v314 = vpop.f32.mrf.mxu0
    %v315 = vadd.f32 0.0, %v314
    %v316 = vpop.f32.mrf.mxu0
    %317 = vmatprep.mubr.f32.mxu0 0.0
    %v318 = vand.u32 %v134, 4294901760
    %v319 = vsub.f32 %v134, %v318
    %v320 = vand.u32 %v319, 4294901760
    %v321 = vsub.f32 %v319, %v320
    %v322 = vand.u32 %v321, 4294901760
    %323 = vmatmul.mubr.f32.gmra.mxu0 %v322
    %v324 = vpop.f32.mrf.mxu0
    %v325 = vadd.f32 0.0, %v324
    %v326 = vpop.f32.mrf.mxu0
    %327 = vmatprep.mubr.f32.mxu0 0.0
    %v328 = vand.u32 %v137, 4294901760
    %v329 = vsub.f32 %v137, %v328
    %v330 = vand.u32 %v329, 4294901760
    %v331 = vsub.f32 %v329, %v330
    %v332 = vand.u32 %v331, 4294901760
    %333 = vmatmul.mubr.f32.gmra.mxu0 %v332
    %v334 = vpop.f32.mrf.mxu0
    %v335 = vadd.f32 0.0, %v334
    %v336 = vpop.f32.mrf.mxu0
    %337 = vmatprep.mubr.f32.mxu0 0.0
    %v338 = vand.u32 %v140, 4294901760
    %v339 = vsub.f32 %v140, %v338
    %v340 = vand.u32 %v339, 4294901760
    %v341 = vsub.f32 %v339, %v340
    %v342 = vand.u32 %v341, 4294901760
    %343 = vmatmul.mubr.f32.gmra.mxu0 %v342
    %v344 = vpop.f32.mrf.mxu0
    %v345 = vadd.f32 0.0, %v344
    %v346 = vpop.f32.mrf.mxu0
    %347 = vmatprep.mubr.f32.mxu0 0.0
    %v348 = vand.u32 %v143, 4294901760
    %v349 = vsub.f32 %v143, %v348
    %v350 = vand.u32 %v349, 4294901760
    %v351 = vsub.f32 %v349, %v350
    %v352 = vand.u32 %v351, 4294901760
    %353 = vmatmul.mubr.f32.gmra.mxu0 %v352
    %v354 = vpop.f32.mrf.mxu0
    %v355 = vadd.f32 0.0, %v354
    %v356 = vpop.f32.mrf.mxu0
    %357 = vmatprep.mubr.f32.mxu0 0.0
    %v358 = vand.u32 %v146, 4294901760
    %v359 = vsub.f32 %v146, %v358
    %v360 = vand.u32 %v359, 4294901760
    %v361 = vsub.f32 %v359, %v360
    %v362 = vand.u32 %v361, 4294901760
    %363 = vmatmul.mubr.f32.gmra.mxu0 %v362
    %v364 = vpop.f32.mrf.mxu0
    %v365 = vadd.f32 0.0, %v364
    %v366 = vpop.f32.mrf.mxu0
    %367 = vmatprep.mubr.f32.mxu0 0.0
    %v368 = vand.u32 %v149, 4294901760
    %v369 = vsub.f32 %v149, %v368
    %v370 = vand.u32 %v369, 4294901760
    %v371 = vsub.f32 %v369, %v370
    %v372 = vand.u32 %v371, 4294901760
    %373 = vmatmul.mubr.f32.gmra.mxu0 %v372
    %v374 = vpop.f32.mrf.mxu0
    %v375 = vadd.f32 0.0, %v374
    %v376 = vpop.f32.mrf.mxu0
    %377 = vdwg.mxu0
    %378 = vmatprep.subr.mxu0 0.0
    %379 = vmatpush1.msra.mxu0 0.0
    %380 = vmatprep.subr.mxu0 0.0
    %381 = vmatpush1.msra.mxu0 0.0
    %382 = vmatprep.subr.mxu0 0.0
    %383 = vmatpush1.msra.mxu0 0.0
    %384 = vmatprep.subr.mxu0 0.0
    %385 = vmatpush1.msra.mxu0 0.0
    %386 = vmatprep.subr.mxu0 0.0
    %387 = vmatpush1.msra.mxu0 0.0
    %388 = vmatprep.subr.mxu0 0.0
    %389 = vmatpush1.msra.mxu0 0.0
    %390 = vmatprep.subr.mxu0 0.0
    %391 = vmatpush1.msra.mxu0 0.0
    %392 = vmatprep.subr.mxu0 0.0
    %393 = vmatpush1.msra.mxu0 0.0
    %394 = vmatprep.subr.mxu0 0.0
    %395 = vmatpush1.msra.mxu0 0.0
    %396 = vmatprep.subr.mxu0 0.0
    %397 = vmatpush1.msra.mxu0 0.0
    %398 = vmatprep.subr.mxu0 0.0
    %399 = vmatpush1.msra.mxu0 0.0
    %400 = vmatprep.subr.mxu0 0.0
    %401 = vmatpush1.msra.mxu0 0.0
    %402 = vmatprep.subr.mxu0 0.0
    %403 = vmatpush1.msra.mxu0 0.0
    %404 = vmatprep.subr.mxu0 0.0
    %405 = vmatpush1.msra.mxu0 0.0
    %406 = vmatprep.subr.mxu0 0.0
    %v407 = vand.u32 %v59, 4294901760
    %v408 = vsub.f32 %v59, %v407
    %v409 = vand.u32 %v408, 4294901760
    %v410 = vsub.f32 %v408, %v409
    %v411 = vand.u32 %v410, 4294901760
    %412 = vmatpush1.msra.mxu0 %v411
    %413 = vmatprep.subr.mxu0 0.0
    %v414 = vand.u32 %v58, 4294901760
    %v415 = vsub.f32 %v58, %v414
    %v416 = vand.u32 %v415, 4294901760
    %v417 = vsub.f32 %v415, %v416
    %v418 = vand.u32 %v417, 4294901760
    %419 = vmatpush1.msra.mxu0 %v418
    %420 = vmatprep.subr.mxu0 0.0
    %421 = vmatpush2.msra.mxu0 0.0
    %422 = vmatprep.subr.mxu0 0.0
    %423 = vmatpush2.msra.mxu0 0.0
    %424 = vmatprep.subr.mxu0 0.0
    %425 = vmatpush2.msra.mxu0 0.0
    %426 = vmatprep.subr.mxu0 0.0
    %427 = vmatpush2.msra.mxu0 0.0
    %428 = vmatprep.subr.mxu0 0.0
    %429 = vmatpush2.msra.mxu0 0.0
    %430 = vmatprep.subr.mxu0 0.0
    %431 = vmatpush2.msra.mxu0 0.0
    %432 = vmatprep.subr.mxu0 0.0
    %433 = vmatpush2.msra.mxu0 0.0
    %434 = vmatprep.subr.mxu0 0.0
    %435 = vmatpush2.msra.mxu0 0.0
    %436 = vmatprep.subr.mxu0 0.0
    %437 = vmatpush2.msra.mxu0 0.0
    %438 = vmatprep.subr.mxu0 0.0
    %439 = vmatpush2.msra.mxu0 0.0
    %440 = vmatprep.subr.mxu0 0.0
    %441 = vmatpush2.msra.mxu0 0.0
    %442 = vmatprep.subr.mxu0 0.0
    %443 = vmatpush2.msra.mxu0 0.0
    %444 = vmatprep.subr.mxu0 0.0
    %445 = vmatpush2.msra.mxu0 0.0
    %446 = vmatprep.subr.mxu0 0.0
    %447 = vmatpush2.msra.mxu0 0.0
    %448 = vmatprep.subr.mxu0 0.0
    %449 = vmatpush2.msra.mxu0 0.0
    %450 = vmatprep.subr.mxu0 0.0
    %451 = vmatpush2.msra.mxu0 0.0
    %452 = vmatprep.mubr.f32.mxu0 0.0
    %v453 = vand.u32 %v104, 4294901760
    %454 = vmatmul.mubr.f32.gmra.mxu0 %v453
    %v455 = vpop.f32.mrf.mxu0
    %v456 = vadd.f32 %v225, %v455
    %v457 = vpop.f32.mrf.mxu0
    %458 = vmatprep.mubr.f32.mxu0 0.0
    %v459 = vand.u32 %v107, 4294901760
    %460 = vmatmul.mubr.f32.gmra.mxu0 %v459
    %v461 = vpop.f32.mrf.mxu0
    %v462 = vadd.f32 %v235, %v461
    %v463 = vpop.f32.mrf.mxu0
    %464 = vmatprep.mubr.f32.mxu0 0.0
    %v465 = vand.u32 %v110, 4294901760
    %466 = vmatmul.mubr.f32.gmra.mxu0 %v465
    %v467 = vpop.f32.mrf.mxu0
    %v468 = vadd.f32 %v245, %v467
    %v469 = vpop.f32.mrf.mxu0
    %470 = vmatprep.mubr.f32.mxu0 0.0
    %v471 = vand.u32 %v113, 4294901760
    %472 = vmatmul.mubr.f32.gmra.mxu0 %v471
    %v473 = vpop.f32.mrf.mxu0
    %v474 = vadd.f32 %v255, %v473
    %v475 = vpop.f32.mrf.mxu0
    %476 = vmatprep.mubr.f32.mxu0 0.0
    %v477 = vand.u32 %v116, 4294901760
    %478 = vmatmul.mubr.f32.gmra.mxu0 %v477
    %v479 = vpop.f32.mrf.mxu0
    %v480 = vadd.f32 %v265, %v479
    %v481 = vpop.f32.mrf.mxu0
    %482 = vmatprep.mubr.f32.mxu0 0.0
    %v483 = vand.u32 %v119, 4294901760
    %484 = vmatmul.mubr.f32.gmra.mxu0 %v483
    %v485 = vpop.f32.mrf.mxu0
    %v486 = vadd.f32 %v275, %v485
    %v487 = vpop.f32.mrf.mxu0
    %488 = vmatprep.mubr.f32.mxu0 0.0
    %v489 = vand.u32 %v122, 4294901760
    %490 = vmatmul.mubr.f32.gmra.mxu0 %v489
    %v491 = vpop.f32.mrf.mxu0
    %v492 = vadd.f32 %v285, %v491
    %v493 = vpop.f32.mrf.mxu0
    %494 = vmatprep.mubr.f32.mxu0 0.0
    %v495 = vand.u32 %v125, 4294901760
    %496 = vmatmul.mubr.f32.gmra.mxu0 %v495
    %v497 = vpop.f32.mrf.mxu0
    %v498 = vadd.f32 %v295, %v497
    %v499 = vpop.f32.mrf.mxu0
    %500 = vmatprep.mubr.f32.mxu0 0.0
    %v501 = vand.u32 %v128, 4294901760
    %502 = vmatmul.mubr.f32.gmra.mxu0 %v501
    %v503 = vpop.f32.mrf.mxu0
    %v504 = vadd.f32 %v305, %v503
    %v505 = vpop.f32.mrf.mxu0
    %506 = vmatprep.mubr.f32.mxu0 0.0
    %v507 = vand.u32 %v131, 4294901760
    %508 = vmatmul.mubr.f32.gmra.mxu0 %v507
    %v509 = vpop.f32.mrf.mxu0
    %v510 = vadd.f32 %v315, %v509
    %v511 = vpop.f32.mrf.mxu0
    %512 = vmatprep.mubr.f32.mxu0 0.0
    %v513 = vand.u32 %v134, 4294901760
    %514 = vmatmul.mubr.f32.gmra.mxu0 %v513
    %v515 = vpop.f32.mrf.mxu0
    %v516 = vadd.f32 %v325, %v515
    %v517 = vpop.f32.mrf.mxu0
    %518 = vmatprep.mubr.f32.mxu0 0.0
    %v519 = vand.u32 %v137, 4294901760
    %520 = vmatmul.mubr.f32.gmra.mxu0 %v519
    %v521 = vpop.f32.mrf.mxu0
    %v522 = vadd.f32 %v335, %v521
    %v523 = vpop.f32.mrf.mxu0
    %524 = vmatprep.mubr.f32.mxu0 0.0
    %v525 = vand.u32 %v140, 4294901760
    %526 = vmatmul.mubr.f32.gmra.mxu0 %v525
    %v527 = vpop.f32.mrf.mxu0
    %v528 = vadd.f32 %v345, %v527
    %v529 = vpop.f32.mrf.mxu0
    %530 = vmatprep.mubr.f32.mxu0 0.0
    %v531 = vand.u32 %v143, 4294901760
    %532 = vmatmul.mubr.f32.gmra.mxu0 %v531
    %v533 = vpop.f32.mrf.mxu0
    %v534 = vadd.f32 %v355, %v533
    %v535 = vpop.f32.mrf.mxu0
    %536 = vmatprep.mubr.f32.mxu0 0.0
    %v537 = vand.u32 %v146, 4294901760
    %538 = vmatmul.mubr.f32.gmra.mxu0 %v537
    %v539 = vpop.f32.mrf.mxu0
    %v540 = vadd.f32 %v365, %v539
    %v541 = vpop.f32.mrf.mxu0
    %542 = vmatprep.mubr.f32.mxu0 0.0
    %v543 = vand.u32 %v149, 4294901760
    %544 = vmatmul.mubr.f32.gmra.mxu0 %v543
    %v545 = vpop.f32.mrf.mxu0
    %v546 = vadd.f32 %v375, %v545
    %v547 = vpop.f32.mrf.mxu0
    %548 = vdwg.mxu0
    %549 = vmatprep.subr.mxu0 0.0
    %550 = vmatpush1.msra.mxu0 0.0
    %551 = vmatprep.subr.mxu0 0.0
    %552 = vmatpush1.msra.mxu0 0.0
    %553 = vmatprep.subr.mxu0 0.0
    %554 = vmatpush1.msra.mxu0 0.0
    %555 = vmatprep.subr.mxu0 0.0
    %556 = vmatpush1.msra.mxu0 0.0
    %557 = vmatprep.subr.mxu0 0.0
    %558 = vmatpush1.msra.mxu0 0.0
    %559 = vmatprep.subr.mxu0 0.0
    %560 = vmatpush1.msra.mxu0 0.0
    %561 = vmatprep.subr.mxu0 0.0
    %562 = vmatpush1.msra.mxu0 0.0
    %563 = vmatprep.subr.mxu0 0.0
    %564 = vmatpush1.msra.mxu0 0.0
    %565 = vmatprep.subr.mxu0 0.0
    %566 = vmatpush1.msra.mxu0 0.0
    %567 = vmatprep.subr.mxu0 0.0
    %568 = vmatpush1.msra.mxu0 0.0
    %569 = vmatprep.subr.mxu0 0.0
    %570 = vmatpush1.msra.mxu0 0.0
    %571 = vmatprep.subr.mxu0 0.0
    %572 = vmatpush1.msra.mxu0 0.0
    %573 = vmatprep.subr.mxu0 0.0
    %574 = vmatpush1.msra.mxu0 0.0
    %575 = vmatprep.subr.mxu0 0.0
    %576 = vmatpush1.msra.mxu0 0.0
    %577 = vmatprep.subr.mxu0 0.0
    %v578 = vand.u32 %v59, 4294901760
    %v579 = vsub.f32 %v59, %v578
    %580 = vmatpush1.msra.mxu0 %v579
    %581 = vmatprep.subr.mxu0 0.0
    %v582 = vand.u32 %v58, 4294901760
    %v583 = vsub.f32 %v58, %v582
    %584 = vmatpush1.msra.mxu0 %v583
    %585 = vmatprep.subr.mxu0 0.0
    %586 = vmatpush2.msra.mxu0 0.0
    %587 = vmatprep.subr.mxu0 0.0
    %588 = vmatpush2.msra.mxu0 0.0
    %589 = vmatprep.subr.mxu0 0.0
    %590 = vmatpush2.msra.mxu0 0.0
    %591 = vmatprep.subr.mxu0 0.0
    %592 = vmatpush2.msra.mxu0 0.0
    %593 = vmatprep.subr.mxu0 0.0
    %594 = vmatpush2.msra.mxu0 0.0
    %595 = vmatprep.subr.mxu0 0.0
    %596 = vmatpush2.msra.mxu0 0.0
    %597 = vmatprep.subr.mxu0 0.0
    %598 = vmatpush2.msra.mxu0 0.0
    %599 = vmatprep.subr.mxu0 0.0
    %600 = vmatpush2.msra.mxu0 0.0
    %601 = vmatprep.subr.mxu0 0.0
    %602 = vmatpush2.msra.mxu0 0.0
    %603 = vmatprep.subr.mxu0 0.0
    %604 = vmatpush2.msra.mxu0 0.0
    %605 = vmatprep.subr.mxu0 0.0
    %606 = vmatpush2.msra.mxu0 0.0
    %607 = vmatprep.subr.mxu0 0.0
    %608 = vmatpush2.msra.mxu0 0.0
    %609 = vmatprep.subr.mxu0 0.0
    %610 = vmatpush2.msra.mxu0 0.0
    %611 = vmatprep.subr.mxu0 0.0
    %612 = vmatpush2.msra.mxu0 0.0
    %613 = vmatprep.subr.mxu0 0.0
    %614 = vmatpush2.msra.mxu0 0.0
    %615 = vmatprep.subr.mxu0 0.0
    %616 = vmatpush2.msra.mxu0 0.0
    %617 = vmatprep.mubr.f32.mxu0 0.0
    %v618 = vand.u32 %v104, 4294901760
    %v619 = vsub.f32 %v104, %v618
    %620 = vmatmul.mubr.f32.gmra.mxu0 %v619
    %v621 = vpop.f32.mrf.mxu0
    %v622 = vadd.f32 %v456, %v621
    %v623 = vpop.f32.mrf.mxu0
    %624 = vmatprep.mubr.f32.mxu0 0.0
    %v625 = vand.u32 %v107, 4294901760
    %v626 = vsub.f32 %v107, %v625
    %627 = vmatmul.mubr.f32.gmra.mxu0 %v626
    %v628 = vpop.f32.mrf.mxu0
    %v629 = vadd.f32 %v462, %v628
    %v630 = vpop.f32.mrf.mxu0
    %631 = vmatprep.mubr.f32.mxu0 0.0
    %v632 = vand.u32 %v110, 4294901760
    %v633 = vsub.f32 %v110, %v632
    %634 = vmatmul.mubr.f32.gmra.mxu0 %v633
    %v635 = vpop.f32.mrf.mxu0
    %v636 = vadd.f32 %v468, %v635
    %v637 = vpop.f32.mrf.mxu0
    %638 = vmatprep.mubr.f32.mxu0 0.0
    %v639 = vand.u32 %v113, 4294901760
    %v640 = vsub.f32 %v113, %v639
    %641 = vmatmul.mubr.f32.gmra.mxu0 %v640
    %v642 = vpop.f32.mrf.mxu0
    %v643 = vadd.f32 %v474, %v642
    %v644 = vpop.f32.mrf.mxu0
    %645 = vmatprep.mubr.f32.mxu0 0.0
    %v646 = vand.u32 %v116, 4294901760
    %v647 = vsub.f32 %v116, %v646
    %648 = vmatmul.mubr.f32.gmra.mxu0 %v647
    %v649 = vpop.f32.mrf.mxu0
    %v650 = vadd.f32 %v480, %v649
    %v651 = vpop.f32.mrf.mxu0
    %652 = vmatprep.mubr.f32.mxu0 0.0
    %v653 = vand.u32 %v119, 4294901760
    %v654 = vsub.f32 %v119, %v653
    %655 = vmatmul.mubr.f32.gmra.mxu0 %v654
    %v656 = vpop.f32.mrf.mxu0
    %v657 = vadd.f32 %v486, %v656
    %v658 = vpop.f32.mrf.mxu0
    %659 = vmatprep.mubr.f32.mxu0 0.0
    %v660 = vand.u32 %v122, 4294901760
    %v661 = vsub.f32 %v122, %v660
    %662 = vmatmul.mubr.f32.gmra.mxu0 %v661
    %v663 = vpop.f32.mrf.mxu0
    %v664 = vadd.f32 %v492, %v663
    %v665 = vpop.f32.mrf.mxu0
    %666 = vmatprep.mubr.f32.mxu0 0.0
    %v667 = vand.u32 %v125, 4294901760
    %v668 = vsub.f32 %v125, %v667
    %669 = vmatmul.mubr.f32.gmra.mxu0 %v668
    %v670 = vpop.f32.mrf.mxu0
    %v671 = vadd.f32 %v498, %v670
    %v672 = vpop.f32.mrf.mxu0
    %673 = vmatprep.mubr.f32.mxu0 0.0
    %v674 = vand.u32 %v128, 4294901760
    %v675 = vsub.f32 %v128, %v674
    %676 = vmatmul.mubr.f32.gmra.mxu0 %v675
    %v677 = vpop.f32.mrf.mxu0
    %v678 = vadd.f32 %v504, %v677
    %v679 = vpop.f32.mrf.mxu0
    %680 = vmatprep.mubr.f32.mxu0 0.0
    %v681 = vand.u32 %v131, 4294901760
    %v682 = vsub.f32 %v131, %v681
    %683 = vmatmul.mubr.f32.gmra.mxu0 %v682
    %v684 = vpop.f32.mrf.mxu0
    %v685 = vadd.f32 %v510, %v684
    %v686 = vpop.f32.mrf.mxu0
    %687 = vmatprep.mubr.f32.mxu0 0.0
    %v688 = vand.u32 %v134, 4294901760
    %v689 = vsub.f32 %v134, %v688
    %690 = vmatmul.mubr.f32.gmra.mxu0 %v689
    %v691 = vpop.f32.mrf.mxu0
    %v692 = vadd.f32 %v516, %v691
    %v693 = vpop.f32.mrf.mxu0
    %694 = vmatprep.mubr.f32.mxu0 0.0
    %v695 = vand.u32 %v137, 4294901760
    %v696 = vsub.f32 %v137, %v695
    %697 = vmatmul.mubr.f32.gmra.mxu0 %v696
    %v698 = vpop.f32.mrf.mxu0
    %v699 = vadd.f32 %v522, %v698
    %v700 = vpop.f32.mrf.mxu0
    %701 = vmatprep.mubr.f32.mxu0 0.0
    %v702 = vand.u32 %v140, 4294901760
    %v703 = vsub.f32 %v140, %v702
    %704 = vmatmul.mubr.f32.gmra.mxu0 %v703
    %v705 = vpop.f32.mrf.mxu0
    %v706 = vadd.f32 %v528, %v705
    %v707 = vpop.f32.mrf.mxu0
    %708 = vmatprep.mubr.f32.mxu0 0.0
    %v709 = vand.u32 %v143, 4294901760
    %v710 = vsub.f32 %v143, %v709
    %711 = vmatmul.mubr.f32.gmra.mxu0 %v710
    %v712 = vpop.f32.mrf.mxu0
    %v713 = vadd.f32 %v534, %v712
    %v714 = vpop.f32.mrf.mxu0
    %715 = vmatprep.mubr.f32.mxu0 0.0
    %v716 = vand.u32 %v146, 4294901760
    %v717 = vsub.f32 %v146, %v716
    %718 = vmatmul.mubr.f32.gmra.mxu0 %v717
    %v719 = vpop.f32.mrf.mxu0
    %v720 = vadd.f32 %v540, %v719
    %v721 = vpop.f32.mrf.mxu0
    %722 = vmatprep.mubr.f32.mxu0 0.0
    %v723 = vand.u32 %v149, 4294901760
    %v724 = vsub.f32 %v149, %v723
    %725 = vmatmul.mubr.f32.gmra.mxu0 %v724
    %v726 = vpop.f32.mrf.mxu0
    %v727 = vadd.f32 %v546, %v726
    %v728 = vpop.f32.mrf.mxu0
    %729 = vdwg.mxu0
    %730 = vmatprep.subr.mxu0 0.0
    %731 = vmatpush1.msra.mxu0 0.0
    %732 = vmatprep.subr.mxu0 0.0
    %733 = vmatpush1.msra.mxu0 0.0
    %734 = vmatprep.subr.mxu0 0.0
    %735 = vmatpush1.msra.mxu0 0.0
    %736 = vmatprep.subr.mxu0 0.0
    %737 = vmatpush1.msra.mxu0 0.0
    %738 = vmatprep.subr.mxu0 0.0
    %739 = vmatpush1.msra.mxu0 0.0
    %740 = vmatprep.subr.mxu0 0.0
    %741 = vmatpush1.msra.mxu0 0.0
    %742 = vmatprep.subr.mxu0 0.0
    %743 = vmatpush1.msra.mxu0 0.0
    %744 = vmatprep.subr.mxu0 0.0
    %745 = vmatpush1.msra.mxu0 0.0
    %746 = vmatprep.subr.mxu0 0.0
    %747 = vmatpush1.msra.mxu0 0.0
    %748 = vmatprep.subr.mxu0 0.0
    %749 = vmatpush1.msra.mxu0 0.0
    %750 = vmatprep.subr.mxu0 0.0
    %751 = vmatpush1.msra.mxu0 0.0
    %752 = vmatprep.subr.mxu0 0.0
    %753 = vmatpush1.msra.mxu0 0.0
    %754 = vmatprep.subr.mxu0 0.0
    %755 = vmatpush1.msra.mxu0 0.0
    %756 = vmatprep.subr.mxu0 0.0
    %757 = vmatpush1.msra.mxu0 0.0
    %758 = vmatprep.subr.mxu0 0.0
    %v759 = vand.u32 %v59, 4294901760
    %760 = vmatpush1.msra.mxu0 %v759
    %761 = vmatprep.subr.mxu0 0.0
    %v762 = vand.u32 %v58, 4294901760
    %763 = vmatpush1.msra.mxu0 %v762
    %764 = vmatprep.subr.mxu0 0.0
    %765 = vmatpush2.msra.mxu0 0.0
    %766 = vmatprep.subr.mxu0 0.0
    %767 = vmatpush2.msra.mxu0 0.0
    %768 = vmatprep.subr.mxu0 0.0
    %769 = vmatpush2.msra.mxu0 0.0
    %770 = vmatprep.subr.mxu0 0.0
    %771 = vmatpush2.msra.mxu0 0.0
    %772 = vmatprep.subr.mxu0 0.0
    %773 = vmatpush2.msra.mxu0 0.0
    %774 = vmatprep.subr.mxu0 0.0
    %775 = vmatpush2.msra.mxu0 0.0
    %776 = vmatprep.subr.mxu0 0.0
    %777 = vmatpush2.msra.mxu0 0.0
    %778 = vmatprep.subr.mxu0 0.0
    %779 = vmatpush2.msra.mxu0 0.0
    %780 = vmatprep.subr.mxu0 0.0
    %781 = vmatpush2.msra.mxu0 0.0
    %782 = vmatprep.subr.mxu0 0.0
    %783 = vmatpush2.msra.mxu0 0.0
    %784 = vmatprep.subr.mxu0 0.0
    %785 = vmatpush2.msra.mxu0 0.0
    %786 = vmatprep.subr.mxu0 0.0
    %787 = vmatpush2.msra.mxu0 0.0
    %788 = vmatprep.subr.mxu0 0.0
    %789 = vmatpush2.msra.mxu0 0.0
    %790 = vmatprep.subr.mxu0 0.0
    %791 = vmatpush2.msra.mxu0 0.0
    %792 = vmatprep.subr.mxu0 0.0
    %793 = vmatpush2.msra.mxu0 0.0
    %794 = vmatprep.subr.mxu0 0.0
    %795 = vmatpush2.msra.mxu0 0.0
    %796 = vmatprep.mubr.f32.mxu0 0.0
    %v797 = vand.u32 %v104, 4294901760
    %v798 = vsub.f32 %v104, %v797
    %v799 = vand.u32 %v798, 4294901760
    %800 = vmatmul.mubr.f32.gmra.mxu0 %v799
    %v801 = vpop.f32.mrf.mxu0
    %v802 = vadd.f32 %v622, %v801
    %v803 = vpop.f32.mrf.mxu0
    %804 = vmatprep.mubr.f32.mxu0 0.0
    %v805 = vand.u32 %v107, 4294901760
    %v806 = vsub.f32 %v107, %v805
    %v807 = vand.u32 %v806, 4294901760
    %808 = vmatmul.mubr.f32.gmra.mxu0 %v807
    %v809 = vpop.f32.mrf.mxu0
    %v810 = vadd.f32 %v629, %v809
    %v811 = vpop.f32.mrf.mxu0
    %812 = vmatprep.mubr.f32.mxu0 0.0
    %v813 = vand.u32 %v110, 4294901760
    %v814 = vsub.f32 %v110, %v813
    %v815 = vand.u32 %v814, 4294901760
    %816 = vmatmul.mubr.f32.gmra.mxu0 %v815
    %v817 = vpop.f32.mrf.mxu0
    %v818 = vadd.f32 %v636, %v817
    %v819 = vpop.f32.mrf.mxu0
    %820 = vmatprep.mubr.f32.mxu0 0.0
    %v821 = vand.u32 %v113, 4294901760
    %v822 = vsub.f32 %v113, %v821
    %v823 = vand.u32 %v822, 4294901760
    %824 = vmatmul.mubr.f32.gmra.mxu0 %v823
    %v825 = vpop.f32.mrf.mxu0
    %v826 = vadd.f32 %v643, %v825
    %v827 = vpop.f32.mrf.mxu0
    %828 = vmatprep.mubr.f32.mxu0 0.0
    %v829 = vand.u32 %v116, 4294901760
    %v830 = vsub.f32 %v116, %v829
    %v831 = vand.u32 %v830, 4294901760
    %832 = vmatmul.mubr.f32.gmra.mxu0 %v831
    %v833 = vpop.f32.mrf.mxu0
    %v834 = vadd.f32 %v650, %v833
    %v835 = vpop.f32.mrf.mxu0
    %836 = vmatprep.mubr.f32.mxu0 0.0
    %v837 = vand.u32 %v119, 4294901760
    %v838 = vsub.f32 %v119, %v837
    %v839 = vand.u32 %v838, 4294901760
    %840 = vmatmul.mubr.f32.gmra.mxu0 %v839
    %v841 = vpop.f32.mrf.mxu0
    %v842 = vadd.f32 %v657, %v841
    %v843 = vpop.f32.mrf.mxu0
    %844 = vmatprep.mubr.f32.mxu0 0.0
    %v845 = vand.u32 %v122, 4294901760
    %v846 = vsub.f32 %v122, %v845
    %v847 = vand.u32 %v846, 4294901760
    %848 = vmatmul.mubr.f32.gmra.mxu0 %v847
    %v849 = vpop.f32.mrf.mxu0
    %v850 = vadd.f32 %v664, %v849
    %v851 = vpop.f32.mrf.mxu0
    %852 = vmatprep.mubr.f32.mxu0 0.0
    %v853 = vand.u32 %v125, 4294901760
    %v854 = vsub.f32 %v125, %v853
    %v855 = vand.u32 %v854, 4294901760
    %856 = vmatmul.mubr.f32.gmra.mxu0 %v855
    %v857 = vpop.f32.mrf.mxu0
    %v858 = vadd.f32 %v671, %v857
    %v859 = vpop.f32.mrf.mxu0
    %860 = vmatprep.mubr.f32.mxu0 0.0
    %v861 = vand.u32 %v128, 4294901760
    %v862 = vsub.f32 %v128, %v861
    %v863 = vand.u32 %v862, 4294901760
    %864 = vmatmul.mubr.f32.gmra.mxu0 %v863
    %v865 = vpop.f32.mrf.mxu0
    %v866 = vadd.f32 %v678, %v865
    %v867 = vpop.f32.mrf.mxu0
    %868 = vmatprep.mubr.f32.mxu0 0.0
    %v869 = vand.u32 %v131, 4294901760
    %v870 = vsub.f32 %v131, %v869
    %v871 = vand.u32 %v870, 4294901760
    %872 = vmatmul.mubr.f32.gmra.mxu0 %v871
    %v873 = vpop.f32.mrf.mxu0
    %v874 = vadd.f32 %v685, %v873
    %v875 = vpop.f32.mrf.mxu0
    %876 = vmatprep.mubr.f32.mxu0 0.0
    %v877 = vand.u32 %v134, 4294901760
    %v878 = vsub.f32 %v134, %v877
    %v879 = vand.u32 %v878, 4294901760
    %880 = vmatmul.mubr.f32.gmra.mxu0 %v879
    %v881 = vpop.f32.mrf.mxu0
    %v882 = vadd.f32 %v692, %v881
    %v883 = vpop.f32.mrf.mxu0
    %884 = vmatprep.mubr.f32.mxu0 0.0
    %v885 = vand.u32 %v137, 4294901760
    %v886 = vsub.f32 %v137, %v885
    %v887 = vand.u32 %v886, 4294901760
    %888 = vmatmul.mubr.f32.gmra.mxu0 %v887
    %v889 = vpop.f32.mrf.mxu0
    %v890 = vadd.f32 %v699, %v889
    %v891 = vpop.f32.mrf.mxu0
    %892 = vmatprep.mubr.f32.mxu0 0.0
    %v893 = vand.u32 %v140, 4294901760
    %v894 = vsub.f32 %v140, %v893
    %v895 = vand.u32 %v894, 4294901760
    %896 = vmatmul.mubr.f32.gmra.mxu0 %v895
    %v897 = vpop.f32.mrf.mxu0
    %v898 = vadd.f32 %v706, %v897
    %v899 = vpop.f32.mrf.mxu0
    %900 = vmatprep.mubr.f32.mxu0 0.0
    %v901 = vand.u32 %v143, 4294901760
    %v902 = vsub.f32 %v143, %v901
    %v903 = vand.u32 %v902, 4294901760
    %904 = vmatmul.mubr.f32.gmra.mxu0 %v903
    %v905 = vpop.f32.mrf.mxu0
    %v906 = vadd.f32 %v713, %v905
    %v907 = vpop.f32.mrf.mxu0
    %908 = vmatprep.mubr.f32.mxu0 0.0
    %v909 = vand.u32 %v146, 4294901760
    %v910 = vsub.f32 %v146, %v909
    %v911 = vand.u32 %v910, 4294901760
    %912 = vmatmul.mubr.f32.gmra.mxu0 %v911
    %v913 = vpop.f32.mrf.mxu0
    %v914 = vadd.f32 %v720, %v913
    %v915 = vpop.f32.mrf.mxu0
    %916 = vmatprep.mubr.f32.mxu0 0.0
    %v917 = vand.u32 %v149, 4294901760
    %v918 = vsub.f32 %v149, %v917
    %v919 = vand.u32 %v918, 4294901760
    %920 = vmatmul.mubr.f32.gmra.mxu0 %v919
    %v921 = vpop.f32.mrf.mxu0
    %v922 = vadd.f32 %v727, %v921
    %v923 = vpop.f32.mrf.mxu0
    %924 = vdwg.mxu0
    %925 = vmatprep.subr.mxu0 0.0
    %926 = vmatpush1.msra.mxu0 0.0
    %927 = vmatprep.subr.mxu0 0.0
    %928 = vmatpush1.msra.mxu0 0.0
    %929 = vmatprep.subr.mxu0 0.0
    %930 = vmatpush1.msra.mxu0 0.0
    %931 = vmatprep.subr.mxu0 0.0
    %932 = vmatpush1.msra.mxu0 0.0
    %933 = vmatprep.subr.mxu0 0.0
    %934 = vmatpush1.msra.mxu0 0.0
    %935 = vmatprep.subr.mxu0 0.0
    %936 = vmatpush1.msra.mxu0 0.0
    %937 = vmatprep.subr.mxu0 0.0
    %938 = vmatpush1.msra.mxu0 0.0
    %939 = vmatprep.subr.mxu0 0.0
    %940 = vmatpush1.msra.mxu0 0.0
    %941 = vmatprep.subr.mxu0 0.0
    %942 = vmatpush1.msra.mxu0 0.0
    %943 = vmatprep.subr.mxu0 0.0
    %944 = vmatpush1.msra.mxu0 0.0
    %945 = vmatprep.subr.mxu0 0.0
    %946 = vmatpush1.msra.mxu0 0.0
    %947 = vmatprep.subr.mxu0 0.0
    %948 = vmatpush1.msra.mxu0 0.0
    %949 = vmatprep.subr.mxu0 0.0
    %950 = vmatpush1.msra.mxu0 0.0
    %951 = vmatprep.subr.mxu0 0.0
    %952 = vmatpush1.msra.mxu0 0.0
    %953 = vmatprep.subr.mxu0 0.0
    %v954 = vand.u32 %v59, 4294901760
    %v955 = vsub.f32 %v59, %v954
    %v956 = vand.u32 %v955, 4294901760
    %957 = vmatpush1.msra.mxu0 %v956
    %958 = vmatprep.subr.mxu0 0.0
    %v959 = vand.u32 %v58, 4294901760
    %v960 = vsub.f32 %v58, %v959
    %v961 = vand.u32 %v960, 4294901760
    %962 = vmatpush1.msra.mxu0 %v961
    %963 = vmatprep.subr.mxu0 0.0
    %964 = vmatpush2.msra.mxu0 0.0
    %965 = vmatprep.subr.mxu0 0.0
    %966 = vmatpush2.msra.mxu0 0.0
    %967 = vmatprep.subr.mxu0 0.0
    %968 = vmatpush2.msra.mxu0 0.0
    %969 = vmatprep.subr.mxu0 0.0
    %970 = vmatpush2.msra.mxu0 0.0
    %971 = vmatprep.subr.mxu0 0.0
    %972 = vmatpush2.msra.mxu0 0.0
    %973 = vmatprep.subr.mxu0 0.0
    %974 = vmatpush2.msra.mxu0 0.0
    %975 = vmatprep.subr.mxu0 0.0
    %976 = vmatpush2.msra.mxu0 0.0
    %977 = vmatprep.subr.mxu0 0.0
    %978 = vmatpush2.msra.mxu0 0.0
    %979 = vmatprep.subr.mxu0 0.0
    %980 = vmatpush2.msra.mxu0 0.0
    %981 = vmatprep.subr.mxu0 0.0
    %982 = vmatpush2.msra.mxu0 0.0
    %983 = vmatprep.subr.mxu0 0.0
    %984 = vmatpush2.msra.mxu0 0.0
    %985 = vmatprep.subr.mxu0 0.0
    %986 = vmatpush2.msra.mxu0 0.0
    %987 = vmatprep.subr.mxu0 0.0
    %988 = vmatpush2.msra.mxu0 0.0
    %989 = vmatprep.subr.mxu0 0.0
    %990 = vmatpush2.msra.mxu0 0.0
    %991 = vmatprep.subr.mxu0 0.0
    %992 = vmatpush2.msra.mxu0 0.0
    %993 = vmatprep.subr.mxu0 0.0
    %994 = vmatpush2.msra.mxu0 0.0
    %995 = vmatprep.mubr.f32.mxu0 0.0
    %v996 = vand.u32 %v104, 4294901760
    %997 = vmatmul.mubr.f32.gmra.mxu0 %v996
    %v998 = vpop.f32.mrf.mxu0
    %v999 = vadd.f32 %v802, %v998
    %v1000 = vpop.f32.mrf.mxu0
    %1001 = vmatprep.mubr.f32.mxu0 0.0
    %v1002 = vand.u32 %v107, 4294901760
    %1003 = vmatmul.mubr.f32.gmra.mxu0 %v1002
    %v1004 = vpop.f32.mrf.mxu0
    %v1005 = vadd.f32 %v810, %v1004
    %v1006 = vpop.f32.mrf.mxu0
    %1007 = vmatprep.mubr.f32.mxu0 0.0
    %v1008 = vand.u32 %v110, 4294901760
    %1009 = vmatmul.mubr.f32.gmra.mxu0 %v1008
    %v1010 = vpop.f32.mrf.mxu0
    %v1011 = vadd.f32 %v818, %v1010
    %v1012 = vpop.f32.mrf.mxu0
    %1013 = vmatprep.mubr.f32.mxu0 0.0
    %v1014 = vand.u32 %v113, 4294901760
    %1015 = vmatmul.mubr.f32.gmra.mxu0 %v1014
    %v1016 = vpop.f32.mrf.mxu0
    %v1017 = vadd.f32 %v826, %v1016
    %v1018 = vpop.f32.mrf.mxu0
    %1019 = vmatprep.mubr.f32.mxu0 0.0
    %v1020 = vand.u32 %v116, 4294901760
    %1021 = vmatmul.mubr.f32.gmra.mxu0 %v1020
    %v1022 = vpop.f32.mrf.mxu0
    %v1023 = vadd.f32 %v834, %v1022
    %v1024 = vpop.f32.mrf.mxu0
    %1025 = vmatprep.mubr.f32.mxu0 0.0
    %v1026 = vand.u32 %v119, 4294901760
    %1027 = vmatmul.mubr.f32.gmra.mxu0 %v1026
    %v1028 = vpop.f32.mrf.mxu0
    %v1029 = vadd.f32 %v842, %v1028
    %v1030 = vpop.f32.mrf.mxu0
    %1031 = vmatprep.mubr.f32.mxu0 0.0
    %v1032 = vand.u32 %v122, 4294901760
    %1033 = vmatmul.mubr.f32.gmra.mxu0 %v1032
    %v1034 = vpop.f32.mrf.mxu0
    %v1035 = vadd.f32 %v850, %v1034
    %v1036 = vpop.f32.mrf.mxu0
    %1037 = vmatprep.mubr.f32.mxu0 0.0
    %v1038 = vand.u32 %v125, 4294901760
    %1039 = vmatmul.mubr.f32.gmra.mxu0 %v1038
    %v1040 = vpop.f32.mrf.mxu0
    %v1041 = vadd.f32 %v858, %v1040
    %v1042 = vpop.f32.mrf.mxu0
    %1043 = vmatprep.mubr.f32.mxu0 0.0
    %v1044 = vand.u32 %v128, 4294901760
    %1045 = vmatmul.mubr.f32.gmra.mxu0 %v1044
    %v1046 = vpop.f32.mrf.mxu0
    %v1047 = vadd.f32 %v866, %v1046
    %v1048 = vpop.f32.mrf.mxu0
    %1049 = vmatprep.mubr.f32.mxu0 0.0
    %v1050 = vand.u32 %v131, 4294901760
    %1051 = vmatmul.mubr.f32.gmra.mxu0 %v1050
    %v1052 = vpop.f32.mrf.mxu0
    %v1053 = vadd.f32 %v874, %v1052
    %v1054 = vpop.f32.mrf.mxu0
    %1055 = vmatprep.mubr.f32.mxu0 0.0
    %v1056 = vand.u32 %v134, 4294901760
    %1057 = vmatmul.mubr.f32.gmra.mxu0 %v1056
    %v1058 = vpop.f32.mrf.mxu0
    %v1059 = vadd.f32 %v882, %v1058
    %v1060 = vpop.f32.mrf.mxu0
    %1061 = vmatprep.mubr.f32.mxu0 0.0
    %v1062 = vand.u32 %v137, 4294901760
    %1063 = vmatmul.mubr.f32.gmra.mxu0 %v1062
    %v1064 = vpop.f32.mrf.mxu0
    %v1065 = vadd.f32 %v890, %v1064
    %v1066 = vpop.f32.mrf.mxu0
    %1067 = vmatprep.mubr.f32.mxu0 0.0
    %v1068 = vand.u32 %v140, 4294901760
    %1069 = vmatmul.mubr.f32.gmra.mxu0 %v1068
    %v1070 = vpop.f32.mrf.mxu0
    %v1071 = vadd.f32 %v898, %v1070
    %v1072 = vpop.f32.mrf.mxu0
    %1073 = vmatprep.mubr.f32.mxu0 0.0
    %v1074 = vand.u32 %v143, 4294901760
    %1075 = vmatmul.mubr.f32.gmra.mxu0 %v1074
    %v1076 = vpop.f32.mrf.mxu0
    %v1077 = vadd.f32 %v906, %v1076
    %v1078 = vpop.f32.mrf.mxu0
    %1079 = vmatprep.mubr.f32.mxu0 0.0
    %v1080 = vand.u32 %v146, 4294901760
    %1081 = vmatmul.mubr.f32.gmra.mxu0 %v1080
    %v1082 = vpop.f32.mrf.mxu0
    %v1083 = vadd.f32 %v914, %v1082
    %v1084 = vpop.f32.mrf.mxu0
    %1085 = vmatprep.mubr.f32.mxu0 0.0
    %v1086 = vand.u32 %v149, 4294901760
    %1087 = vmatmul.mubr.f32.gmra.mxu0 %v1086
    %v1088 = vpop.f32.mrf.mxu0
    %v1089 = vadd.f32 %v922, %v1088
    %v1090 = vpop.f32.mrf.mxu0
    %1091 = vdwg.mxu0
    %1092 = vmatprep.subr.mxu0 0.0
    %1093 = vmatpush1.msra.mxu0 0.0
    %1094 = vmatprep.subr.mxu0 0.0
    %1095 = vmatpush1.msra.mxu0 0.0
    %1096 = vmatprep.subr.mxu0 0.0
    %1097 = vmatpush1.msra.mxu0 0.0
    %1098 = vmatprep.subr.mxu0 0.0
    %1099 = vmatpush1.msra.mxu0 0.0
    %1100 = vmatprep.subr.mxu0 0.0
    %1101 = vmatpush1.msra.mxu0 0.0
    %1102 = vmatprep.subr.mxu0 0.0
    %1103 = vmatpush1.msra.mxu0 0.0
    %1104 = vmatprep.subr.mxu0 0.0
    %1105 = vmatpush1.msra.mxu0 0.0
    %1106 = vmatprep.subr.mxu0 0.0
    %1107 = vmatpush1.msra.mxu0 0.0
    %1108 = vmatprep.subr.mxu0 0.0
    %1109 = vmatpush1.msra.mxu0 0.0
    %1110 = vmatprep.subr.mxu0 0.0
    %1111 = vmatpush1.msra.mxu0 0.0
    %1112 = vmatprep.subr.mxu0 0.0
    %1113 = vmatpush1.msra.mxu0 0.0
    %1114 = vmatprep.subr.mxu0 0.0
    %1115 = vmatpush1.msra.mxu0 0.0
    %1116 = vmatprep.subr.mxu0 0.0
    %1117 = vmatpush1.msra.mxu0 0.0
    %1118 = vmatprep.subr.mxu0 0.0
    %1119 = vmatpush1.msra.mxu0 0.0
    %1120 = vmatprep.subr.mxu0 0.0
    %v1121 = vand.u32 %v59, 4294901760
    %1122 = vmatpush1.msra.mxu0 %v1121
    %1123 = vmatprep.subr.mxu0 0.0
    %v1124 = vand.u32 %v58, 4294901760
    %1125 = vmatpush1.msra.mxu0 %v1124
    %1126 = vmatprep.subr.mxu0 0.0
    %1127 = vmatpush2.msra.mxu0 0.0
    %1128 = vmatprep.subr.mxu0 0.0
    %1129 = vmatpush2.msra.mxu0 0.0
    %1130 = vmatprep.subr.mxu0 0.0
    %1131 = vmatpush2.msra.mxu0 0.0
    %1132 = vmatprep.subr.mxu0 0.0
    %1133 = vmatpush2.msra.mxu0 0.0
    %1134 = vmatprep.subr.mxu0 0.0
    %1135 = vmatpush2.msra.mxu0 0.0
    %1136 = vmatprep.subr.mxu0 0.0
    %1137 = vmatpush2.msra.mxu0 0.0
    %1138 = vmatprep.subr.mxu0 0.0
    %1139 = vmatpush2.msra.mxu0 0.0
    %1140 = vmatprep.subr.mxu0 0.0
    %1141 = vmatpush2.msra.mxu0 0.0
    %1142 = vmatprep.subr.mxu0 0.0
    %1143 = vmatpush2.msra.mxu0 0.0
    %1144 = vmatprep.subr.mxu0 0.0
    %1145 = vmatpush2.msra.mxu0 0.0
    %1146 = vmatprep.subr.mxu0 0.0
    %1147 = vmatpush2.msra.mxu0 0.0
    %1148 = vmatprep.subr.mxu0 0.0
    %1149 = vmatpush2.msra.mxu0 0.0
    %1150 = vmatprep.subr.mxu0 0.0
    %1151 = vmatpush2.msra.mxu0 0.0
    %1152 = vmatprep.subr.mxu0 0.0
    %1153 = vmatpush2.msra.mxu0 0.0
    %1154 = vmatprep.subr.mxu0 0.0
    %1155 = vmatpush2.msra.mxu0 0.0
    %1156 = vmatprep.subr.mxu0 0.0
    %1157 = vmatpush2.msra.mxu0 0.0
    %1158 = vmatprep.mubr.f32.mxu0 0.0
    %v1159 = vand.u32 %v104, 4294901760
    %1160 = vmatmul.mubr.f32.gmra.mxu0 %v1159
    %v1161 = vpop.f32.mrf.mxu0
    %v1162 = vadd.f32 %v999, %v1161
    %v1163 = vpop.f32.mrf.mxu0
    %1164 = vmatprep.mubr.f32.mxu0 0.0
    %v1165 = vand.u32 %v107, 4294901760
    %1166 = vmatmul.mubr.f32.gmra.mxu0 %v1165
    %v1167 = vpop.f32.mrf.mxu0
    %v1168 = vadd.f32 %v1005, %v1167
    %v1169 = vpop.f32.mrf.mxu0
    %1170 = vmatprep.mubr.f32.mxu0 0.0
    %v1171 = vand.u32 %v110, 4294901760
    %1172 = vmatmul.mubr.f32.gmra.mxu0 %v1171
    %v1173 = vpop.f32.mrf.mxu0
    %v1174 = vadd.f32 %v1011, %v1173
    %v1175 = vpop.f32.mrf.mxu0
    %1176 = vmatprep.mubr.f32.mxu0 0.0
    %v1177 = vand.u32 %v113, 4294901760
    %1178 = vmatmul.mubr.f32.gmra.mxu0 %v1177
    %v1179 = vpop.f32.mrf.mxu0
    %v1180 = vadd.f32 %v1017, %v1179
    %v1181 = vpop.f32.mrf.mxu0
    %1182 = vmatprep.mubr.f32.mxu0 0.0
    %v1183 = vand.u32 %v116, 4294901760
    %1184 = vmatmul.mubr.f32.gmra.mxu0 %v1183
    %v1185 = vpop.f32.mrf.mxu0
    %v1186 = vadd.f32 %v1023, %v1185
    %v1187 = vpop.f32.mrf.mxu0
    %1188 = vmatprep.mubr.f32.mxu0 0.0
    %v1189 = vand.u32 %v119, 4294901760
    %1190 = vmatmul.mubr.f32.gmra.mxu0 %v1189
    %v1191 = vpop.f32.mrf.mxu0
    %v1192 = vadd.f32 %v1029, %v1191
    %v1193 = vpop.f32.mrf.mxu0
    %1194 = vmatprep.mubr.f32.mxu0 0.0
    %v1195 = vand.u32 %v122, 4294901760
    %1196 = vmatmul.mubr.f32.gmra.mxu0 %v1195
    %v1197 = vpop.f32.mrf.mxu0
    %v1198 = vadd.f32 %v1035, %v1197
    %v1199 = vpop.f32.mrf.mxu0
    %1200 = vmatprep.mubr.f32.mxu0 0.0
    %v1201 = vand.u32 %v125, 4294901760
    %1202 = vmatmul.mubr.f32.gmra.mxu0 %v1201
    %v1203 = vpop.f32.mrf.mxu0
    %v1204 = vadd.f32 %v1041, %v1203
    %v1205 = vpop.f32.mrf.mxu0
    %1206 = vmatprep.mubr.f32.mxu0 0.0
    %v1207 = vand.u32 %v128, 4294901760
    %1208 = vmatmul.mubr.f32.gmra.mxu0 %v1207
    %v1209 = vpop.f32.mrf.mxu0
    %v1210 = vadd.f32 %v1047, %v1209
    %v1211 = vpop.f32.mrf.mxu0
    %1212 = vmatprep.mubr.f32.mxu0 0.0
    %v1213 = vand.u32 %v131, 4294901760
    %1214 = vmatmul.mubr.f32.gmra.mxu0 %v1213
    %v1215 = vpop.f32.mrf.mxu0
    %v1216 = vadd.f32 %v1053, %v1215
    %v1217 = vpop.f32.mrf.mxu0
    %1218 = vmatprep.mubr.f32.mxu0 0.0
    %v1219 = vand.u32 %v134, 4294901760
    %1220 = vmatmul.mubr.f32.gmra.mxu0 %v1219
    %v1221 = vpop.f32.mrf.mxu0
    %v1222 = vadd.f32 %v1059, %v1221
    %v1223 = vpop.f32.mrf.mxu0
    %1224 = vmatprep.mubr.f32.mxu0 0.0
    %v1225 = vand.u32 %v137, 4294901760
    %1226 = vmatmul.mubr.f32.gmra.mxu0 %v1225
    %v1227 = vpop.f32.mrf.mxu0
    %v1228 = vadd.f32 %v1065, %v1227
    %v1229 = vpop.f32.mrf.mxu0
    %1230 = vmatprep.mubr.f32.mxu0 0.0
    %v1231 = vand.u32 %v140, 4294901760
    %1232 = vmatmul.mubr.f32.gmra.mxu0 %v1231
    %v1233 = vpop.f32.mrf.mxu0
    %v1234 = vadd.f32 %v1071, %v1233
    %v1235 = vpop.f32.mrf.mxu0
    %1236 = vmatprep.mubr.f32.mxu0 0.0
    %v1237 = vand.u32 %v143, 4294901760
    %1238 = vmatmul.mubr.f32.gmra.mxu0 %v1237
    %v1239 = vpop.f32.mrf.mxu0
    %v1240 = vadd.f32 %v1077, %v1239
    %v1241 = vpop.f32.mrf.mxu0
    %1242 = vmatprep.mubr.f32.mxu0 0.0
    %v1243 = vand.u32 %v146, 4294901760
    %1244 = vmatmul.mubr.f32.gmra.mxu0 %v1243
    %v1245 = vpop.f32.mrf.mxu0
    %v1246 = vadd.f32 %v1083, %v1245
    %v1247 = vpop.f32.mrf.mxu0
    %1248 = vmatprep.mubr.f32.mxu0 0.0
    %v1249 = vand.u32 %v149, 4294901760
    %1250 = vmatmul.mubr.f32.gmra.mxu0 %v1249
    %v1251 = vpop.f32.mrf.mxu0
    %v1252 = vadd.f32 %v1089, %v1251
    %v1253 = vpop.f32.mrf.mxu0
    %1254 = vdwg.mxu0
    %v1255 = vmul.f32 %v1162, %v84
    %v1256 = vmul.f32 %v1168, %v85
    %v1257 = vmul.f32 %v1174, %v84
    %v1258 = vmul.f32 %v1180, %v85
    %v1259 = vmul.f32 %v1186, %v84
    %v1260 = vmul.f32 %v1192, %v85
    %v1261 = vmul.f32 %v1198, %v84
    %v1262 = vmul.f32 %v1204, %v85
    %v1263 = vmul.f32 %v1210, %v84
    %v1264 = vmul.f32 %v1216, %v85
    %v1265 = vmul.f32 %v1222, %v84
    %v1266 = vmul.f32 %v1228, %v85
    %v1267 = vmul.f32 %v1234, %v84
    %v1268 = vmul.f32 %v1240, %v85
    %v1269 = vmul.f32 %v1246, %v84
    %v1270 = vmul.f32 %v1252, %v85
    %v1271 = vadd.f32 %v1255, %v1256
    %v1272 = vrot.slane %v1271, 4
    %v1273 = vadd.f32 %v1271, %v1272
    %v1274 = vrot.slane %v1273, 2
    %v1275 = vadd.f32 %v1273, %v1274
    %v1276 = vrot.slane %v1275, 1
    %v1277 = vadd.f32 %v1275, %v1276
    %v1278 = vadd.f32 %v1257, %v1258
    %v1279 = vrot.slane %v1278, 4
    %v1280 = vadd.f32 %v1278, %v1279
    %v1281 = vrot.slane %v1280, 2
    %v1282 = vadd.f32 %v1280, %v1281
    %v1283 = vrot.slane %v1282, 1
    %v1284 = vadd.f32 %v1282, %v1283
    %v1285 = vadd.f32 %v1259, %v1260
    %v1286 = vrot.slane %v1285, 4
    %v1287 = vadd.f32 %v1285, %v1286
    %v1288 = vrot.slane %v1287, 2
    %v1289 = vadd.f32 %v1287, %v1288
    %v1290 = vrot.slane %v1289, 1
    %v1291 = vadd.f32 %v1289, %v1290
    %v1292 = vadd.f32 %v1261, %v1262
    %v1293 = vrot.slane %v1292, 4
    %v1294 = vadd.f32 %v1292, %v1293
    %v1295 = vrot.slane %v1294, 2
    %v1296 = vadd.f32 %v1294, %v1295
    %v1297 = vrot.slane %v1296, 1
    %v1298 = vadd.f32 %v1296, %v1297
    %v1299 = vadd.f32 %v1263, %v1264
    %v1300 = vrot.slane %v1299, 4
    %v1301 = vadd.f32 %v1299, %v1300
    %v1302 = vrot.slane %v1301, 2
    %v1303 = vadd.f32 %v1301, %v1302
    %v1304 = vrot.slane %v1303, 1
    %v1305 = vadd.f32 %v1303, %v1304
    %v1306 = vadd.f32 %v1265, %v1266
    %v1307 = vrot.slane %v1306, 4
    %v1308 = vadd.f32 %v1306, %v1307
    %v1309 = vrot.slane %v1308, 2
    %v1310 = vadd.f32 %v1308, %v1309
    %v1311 = vrot.slane %v1310, 1
    %v1312 = vadd.f32 %v1310, %v1311
    %v1313 = vadd.f32 %v1267, %v1268
    %v1314 = vrot.slane %v1313, 4
    %v1315 = vadd.f32 %v1313, %v1314
    %v1316 = vrot.slane %v1315, 2
    %v1317 = vadd.f32 %v1315, %v1316
    %v1318 = vrot.slane %v1317, 1
    %v1319 = vadd.f32 %v1317, %v1318
    %v1320 = vadd.f32 %v1269, %v1270
    %v1321 = vrot.slane %v1320, 4
    %v1322 = vadd.f32 %v1320, %v1321
    %v1323 = vrot.slane %v1322, 2
    %v1324 = vadd.f32 %v1322, %v1323
    %v1325 = vrot.slane %v1324, 1
    %v1326 = vadd.f32 %v1324, %v1325
    %vm1335 = vcmask 1041409
    %v1336 = vsel %vm1335, %v1284, %v1277
    %vm1337 = vcmask 1042434
    %v1338 = vsel %vm1337, %v1291, %v1336
    %vm1339 = vcmask 1043459
    %v1340 = vsel %vm1339, %v1298, %v1338
    %vm1341 = vcmask 1044484
    %v1342 = vsel %vm1341, %v1305, %v1340
    %vm1343 = vcmask 1045509
    %v1344 = vsel %vm1343, %v1312, %v1342
    %vm1345 = vcmask 1046534
    %v1346 = vsel %vm1345, %v1319, %v1344
    %vm1347 = vcmask 1047559
    %v1348 = vsel %vm1347, %v1326, %v1346
    %1350 = vst [vmem:[#allocation2] sm:$0xff] %v1348
    // Predicated region
    $region10: #{tpu_custom_call.1} parent=1 // pred_check
      _
    $region11: #{tpu_custom_call.1} parent=1 // pred_check_branch
      %1352 = sbr.rel (0) target = $region13
    $region12: #{tpu_custom_call.1} parent=1 // pred_region
      %s1354 = ssub.s32 128, 128
      %1355 = vsyncadd [#allocation3], %s1354
      %s1357 = sshll.u32 [#allocation2], 4
      %s1358 = int_to_ptr.vmem [resolvable:$true] %s1357
      %1360 = dma.vmem_to_hbm [thread:$0]  %s1358, 128, %s2, [#allocation3]
    $region13: #{tpu_custom_call.1} parent=1 // pred_fallthru
      _
    // Predicated region
    $region14: #{tpu_custom_call.1} parent=1 // pred_check
      _
    $region15: #{tpu_custom_call.1} parent=1 // pred_check_branch
      %1362 = sbr.rel (0) target = $region17
    $region16: #{tpu_custom_call.1} parent=1 // pred_region
      %1363 = dma.done [#allocation3], 128
    $region17: #{tpu_custom_call.1} parent=1 // pred_fallthru
      _
    %1364 = vsyncpa [#allocation3], 1

</llo_original>
